<compile_context>
chip_gen: v5e
topology: v5e:2x2
jax: 0.10.0
libtpu: 0.0.40
codegen_flags: <defaults>
</compile_context>

<pallas_src>
import jax
import jax.numpy as jnp
from jax.experimental import pallas as pl
from jax.experimental.pallas import tpu as pltpu

BN_EPS = 1e-5
LANE = 128
SUBLANE_BF16 = 16  # bf16 vreg packs (16, 128)


def _round_up(n, m):
    return ((n + m - 1) // m) * m


def _make_kernel(num_layers, batch, fin, n_out):
    """Layer-streamed fused MLP kernel.

    Grid axis 0 walks layers. The activation lives in a VMEM scratch that
    persists across grid steps; the per-layer weight block is pipelined
    (double-buffered) by Pallas so layer i's matmul hides layer i+1's DMA.
    """
    last = num_layers - 1

    def kernel(x_ref, w_ref, s_ref, o_ref, h_ref):
        l = pl.program_id(0)

        @pl.when(l == 0)
        def _():
            # In-kernel zero-pad + f32 -> bf16 cast of the input.
            h_ref[...] = jnp.zeros_like(h_ref)
            h_ref[0:batch, 0:fin] = x_ref[...].astype(jnp.bfloat16)

        # MXU pass with f32 accumulation; shift (= bias + folded BN) in f32.
        acc = jnp.dot(h_ref[...], w_ref[0], preferred_element_type=jnp.float32)
        acc = acc + s_ref[0]

        @pl.when(l < last)
        def _():
            # ReLU in f32, re-cast to bf16 to feed the next MXU pass.
            h_ref[...] = jnp.maximum(acc, 0.0).astype(jnp.bfloat16)

        @pl.when(l == last)
        def _():
            # Lane-dense (128-multiple) f32 store of the final layer only.
            o_ref[...] = acc[:, 0:n_out].astype(o_ref.dtype)

    return kernel


def nonstat_base_decoder(x, w_stack, shift_stack, output_dim):
    """x: (B, Fin) f32. w_stack: (L, Fp, Fp) bf16 (BN folded, zero padded).
    shift_stack: (L, 1, Fp) f32.  Returns (B, output_dim) f32."""
    B, Fin = x.shape
    L, Fp, _ = w_stack.shape
    Bp = _round_up(B, SUBLANE_BF16)
    No = _round_up(output_dim, LANE)
    assert No <= Fp

    # Per-step VMEM working set (not the full weight stack — it is streamed):
    working = (2 * Fp * Fp * 2      # weight block, bf16, double-buffered
               + 2 * Fp * 4         # shift block, f32, double-buffered
               + 2 * B * Fin * 4    # x (fetched once)
               + 2 * Bp * No * 4    # resident output block
               + Bp * Fp * 2)       # activation scratch
    vmem_limit = min(max(2 * working, 32 << 20), 64 << 20)  # safe on v5e/v6e/v7x

    out = pl.pallas_call(
        _make_kernel(L, B, Fin, No),
        out_shape=jax.ShapeDtypeStruct((Bp, No), jnp.float32),
        grid=(L,),
        in_specs=[
            pl.BlockSpec((B, Fin), lambda l: (0, 0)),        # x: fetched once
            pl.BlockSpec((1, Fp, Fp), lambda l: (l, 0, 0)),  # streamed weights
            pl.BlockSpec((1, 1, Fp), lambda l: (l, 0, 0)),   # streamed shifts
        ],
        out_specs=pl.BlockSpec((Bp, No), lambda l: (0, 0)),
        scratch_shapes=[pltpu.VMEM((Bp, Fp), jnp.bfloat16)],
        compiler_params=pltpu.CompilerParams(
            dimension_semantics=("arbitrary",),
            vmem_limit_bytes=int(vmem_limit),
        ),
    )(x, w_stack, shift_stack)
    return out[:B, :output_dim]


def init_params(key, input_dim, output_dim, hidden_layers):
    """Deterministic synthetic parameters mirroring the PyTorch module's shapes.

    Returns (w_stack bf16, shift_stack f32, raw) with BatchNorm folded into the
    weights/shift and everything zero-padded to a common 128-aligned width.
    """
    dims = list(hidden_layers) + [output_dim]
    num_layers = len(dims)
    f_pad = _round_up(max([input_dim] + dims), LANE)

    w_stack = jnp.zeros((num_layers, f_pad, f_pad), jnp.float32)
    shift_stack = jnp.zeros((num_layers, 1, f_pad), jnp.float32)
    raw = []

    prev = input_dim
    for i, h in enumerate(dims):
        key, kw, kb, kg, kbeta, km, kv = jax.random.split(key, 7)
        # Linear(prev, h): torch weight (h, prev); store transposed (prev, h).
        bound = 1.0 / (prev ** 0.5)
        w = jax.random.uniform(kw, (prev, h), jnp.float32, -bound, bound)
        b = jax.random.uniform(kb, (h,), jnp.float32, -bound, bound)
        is_hidden = i < len(hidden_layers)
        if is_hidden:
            # BatchNorm1d(h) params / running stats (synthetic, non-trivial).
            gamma = 1.0 + 0.1 * jax.random.normal(kg, (h,), jnp.float32)
            beta = 0.1 * jax.random.normal(kbeta, (h,), jnp.float32)
            r_mean = 0.05 * jax.random.normal(km, (h,), jnp.float32)
            r_var = 1.0 + 0.1 * jax.random.uniform(kv, (h,), jnp.float32)
            inv_std = gamma / jnp.sqrt(r_var + BN_EPS)
            # BN(x@W + b) = x @ (W * inv_std) + ((b - mean) * inv_std + beta)
            w_fused = w * inv_std[None, :]
            shift = (b - r_mean) * inv_std + beta
        else:
            w_fused = w
            shift = b
        w_stack = w_stack.at[i, :prev, :h].set(w_fused)
        shift_stack = shift_stack.at[i, 0, :h].set(shift)
        raw.append(dict(w=w_fused, shift=shift, relu=is_hidden))
        prev = h

    return w_stack.astype(jnp.bfloat16), shift_stack, raw


def reference_like_kernel(x, w_stack, shift_stack, output_dim):
    """Same math as the kernel (bf16 operands, f32 accumulate), pure JAX."""
    B, Fin = x.shape
    L, Fp, _ = w_stack.shape
    h = jnp.zeros((B, Fp), jnp.bfloat16).at[:, :Fin].set(x.astype(jnp.bfloat16))
    for i in range(L):
        acc = jnp.dot(h.astype(jnp.float32), w_stack[i].astype(jnp.float32))
        acc = acc + shift_stack[i]
        if i < L - 1:
            h = jnp.maximum(acc, 0.0).astype(jnp.bfloat16)
        else:
            h = acc
    return h[:B, :output_dim]


def reference_f32(x, raw):
    """Full-precision reference of the original module math (eval mode)."""
    h = x
    for p in raw:
        h = h @ p["w"] + p["shift"]
        if p["relu"]:
            h = jnp.maximum(h, 0.0)
    return h


if __name__ == "__main__":
    input_dim, output_dim = 32, 16
    hidden_layers = [64, 32]
    batch = 8

    key = jax.random.PRNGKey(0)
    kx, kp = jax.random.split(key)
    x = jax.random.normal(kx, (batch, input_dim), jnp.float32)
    w_stack, shift_stack, raw = init_params(kp, input_dim, output_dim, hidden_layers)

    out = nonstat_base_decoder(x, w_stack, shift_stack, output_dim)
    out = jax.block_until_ready(out)
    assert out.shape == (batch, output_dim)

    # Exact-structure reference (bf16 operands, f32 accumulation).
    ref_exact = jax.block_until_ready(
        reference_like_kernel(x, w_stack, shift_stack, output_dim))
    assert jnp.allclose(out, ref_exact, atol=1e-3, rtol=1e-3), "mismatch vs bf16 reference"

    # Full-f32 reference of the module math (loose tolerance for bf16 operand cast).
    ref32 = jax.block_until_ready(reference_f32(x, raw))
    assert jnp.allclose(out, ref32, atol=5e-2, rtol=5e-2), "mismatch vs f32 reference"

    print("KERNEL_OK")
</pallas_src>

<mosaic_0001>
module attributes {stable_mosaic.version = 11 : i64} {
  func.func @kernel(%arg0: i32, %arg1: memref<8x32xf32, #tpu.memory_space<vmem>>, %arg2: memref<1x128x128xbf16, #tpu.memory_space<vmem>>, %arg3: memref<1x1x128xf32, #tpu.memory_space<vmem>>, %arg4: memref<16x128xf32, #tpu.memory_space<vmem>>, %arg5: memref<16x128xbf16, #tpu.memory_space<vmem>>) attributes {dimension_semantics = [#tpu.dimension_semantics<arbitrary>], iteration_bounds = array<i64: 3>, scalar_prefetch = 0 : i64, scratch_operands = 1 : i64, tpu.core_type = #tpu.core_type<tc>, window_params = [{pipeline_mode = #tpu.pipeline_mode<synchronous>, transform_indices = @transform_0, window_bounds = array<i64: 8, 32>}, {transform_indices = @transform_1, window_bounds = array<i64: 1, 128, 128>}, {transform_indices = @transform_2, window_bounds = array<i64: 1, 1, 128>}, {pipeline_mode = #tpu.pipeline_mode<synchronous>, transform_indices = @transform_3, window_bounds = array<i64: 16, 128>}]} {
    %c0_i32 = arith.constant 0 : i32
    %0 = arith.cmpi eq, %arg0, %c0_i32 : i32
    %1 = arith.extui %0 : i1 to i32
    %c0_i32_0 = arith.constant 0 : i32
    %2 = arith.cmpi ne, %1, %c0_i32_0 : i32
    scf.if %2 {
      %cst_11 = arith.constant 0.000000e+00 : bf16
      %17 = vector.broadcast %cst_11 : bf16 to vector<16x128xbf16>
      %c0_12 = arith.constant 0 : index
      %c0_13 = arith.constant 0 : index
      %18 = vector.load %arg5[%c0_12, %c0_13] : memref<16x128xbf16, #tpu.memory_space<vmem>>, vector<16x128xbf16>
      tpu.vector_store %arg5[%c0_12, %c0_13], %17 {strides = array<i32>} : memref<16x128xbf16, #tpu.memory_space<vmem>>, vector<16x128xbf16>,
      %c0_14 = arith.constant 0 : index
      %c0_15 = arith.constant 0 : index
      %19 = vector.load %arg1[%c0_14, %c0_15] : memref<8x32xf32, #tpu.memory_space<vmem>>, vector<8x32xf32>
      %20 = arith.truncf %19 : vector<8x32xf32> to vector<8x32xbf16>
      %c0_16 = arith.constant 0 : index
      %c0_17 = arith.constant 0 : index
      %21 = vector.load %arg5[%c0_16, %c0_17] : memref<16x128xbf16, #tpu.memory_space<vmem>>, vector<8x32xbf16>
      tpu.vector_store %arg5[%c0_16, %c0_17], %20 {strides = array<i32>} : memref<16x128xbf16, #tpu.memory_space<vmem>>, vector<8x32xbf16>,
    } else {
    }
    %c0 = arith.constant 0 : index
    %c0_1 = arith.constant 0 : index
    %3 = vector.load %arg5[%c0, %c0_1] : memref<16x128xbf16, #tpu.memory_space<vmem>>, vector<16x128xbf16>
    %c0_2 = arith.constant 0 : index
    %c0_3 = arith.constant 0 : index
    %c0_4 = arith.constant 0 : index
    %4 = vector.load %arg2[%c0_2, %c0_3, %c0_4] : memref<1x128x128xbf16, #tpu.memory_space<vmem>>, vector<1x128x128xbf16>
    %5 = vector.shape_cast %4 : vector<1x128x128xbf16> to vector<128x128xbf16>
    %cst = arith.constant dense<0.000000e+00> : vector<16x128xf32>
    %6 = tpu.matmul %3, %5, %cst {dimension_numbers = #tpu.dot_dimension_numbers<[1], [0], [0], [1], [0, 0, 1, 1], [], []>} : vector<16x128xbf16>, vector<128x128xbf16>, vector<16x128xf32> -> vector<16x128xf32>
    %c0_5 = arith.constant 0 : index
    %c0_6 = arith.constant 0 : index
    %c0_7 = arith.constant 0 : index
    %7 = vector.load %arg3[%c0_5, %c0_6, %c0_7] : memref<1x1x128xf32, #tpu.memory_space<vmem>>, vector<1x1x128xf32>
    %8 = vector.shape_cast %7 : vector<1x1x128xf32> to vector<1x128xf32>
    %9 = vector.broadcast %8 : vector<1x128xf32> to vector<16x128xf32>
    %10 = arith.addf %6, %9 : vector<16x128xf32>
    %c2_i32 = arith.constant 2 : i32
    %11 = arith.cmpi slt, %arg0, %c2_i32 : i32
    %12 = arith.extui %11 : i1 to i32
    %c0_i32_8 = arith.constant 0 : i32
    %13 = arith.cmpi ne, %12, %c0_i32_8 : i32
    scf.if %13 {
      %cst_11 = arith.constant 0.000000e+00 : f32
      %17 = vector.broadcast %cst_11 : f32 to vector<16x128xf32>
      %18 = arith.maximumf %10, %17 : vector<16x128xf32>
      %19 = arith.truncf %18 : vector<16x128xf32> to vector<16x128xbf16>
      %c0_12 = arith.constant 0 : index
      %c0_13 = arith.constant 0 : index
      %20 = vector.load %arg5[%c0_12, %c0_13] : memref<16x128xbf16, #tpu.memory_space<vmem>>, vector<16x128xbf16>
      tpu.vector_store %arg5[%c0_12, %c0_13], %19 {strides = array<i32>} : memref<16x128xbf16, #tpu.memory_space<vmem>>, vector<16x128xbf16>,
    } else {
    }
    %c2_i32_9 = arith.constant 2 : i32
    %14 = arith.cmpi eq, %arg0, %c2_i32_9 : i32
    %15 = arith.extui %14 : i1 to i32
    %c0_i32_10 = arith.constant 0 : i32
    %16 = arith.cmpi ne, %15, %c0_i32_10 : i32
    scf.if %16 {
      %c0_11 = arith.constant 0 : index
      %c0_12 = arith.constant 0 : index
      %17 = vector.load %arg4[%c0_11, %c0_12] : memref<16x128xf32, #tpu.memory_space<vmem>>, vector<16x128xf32>
      tpu.vector_store %arg4[%c0_11, %c0_12], %10 {strides = array<i32>} : memref<16x128xf32, #tpu.memory_space<vmem>>, vector<16x128xf32>,
    } else {
    }
    return
  }
  func.func @transform_0(%arg0: i32) -> (i32, i32) {
    %c0_i32 = arith.constant 0 : i32
    %c0_i32_0 = arith.constant 0 : i32
    %c0_i32_1 = arith.constant 0 : i32
    return %c0_i32, %c0_i32_0 : i32, i32
  }
  func.func @transform_1(%arg0: i32) -> (i32, i32, i32) {
    %c0_i32 = arith.constant 0 : i32
    %c0_i32_0 = arith.constant 0 : i32
    %c0_i32_1 = arith.constant 0 : i32
    return %arg0, %c0_i32, %c0_i32_0 : i32, i32, i32
  }
  func.func @transform_2(%arg0: i32) -> (i32, i32, i32) {
    %c0_i32 = arith.constant 0 : i32
    %c0_i32_0 = arith.constant 0 : i32
    %c0_i32_1 = arith.constant 0 : i32
    return %arg0, %c0_i32, %c0_i32_0 : i32, i32, i32
  }
  func.func @transform_3(%arg0: i32) -> (i32, i32) {
    %c0_i32 = arith.constant 0 : i32
    %c0_i32_0 = arith.constant 0 : i32
    %c0_i32_1 = arith.constant 0 : i32
    return %c0_i32, %c0_i32_0 : i32, i32
  }
}

</mosaic_0001>

<llo_original>
// kernel: tpu_custom_call.1
$region0: #{tpu_custom_call.1}
  #allocation0 [shape = 'u32[]', space=smem, size = 0x4, offset = 0x4, fixed_abs, tag = 'smem constant byte address 0x4 - core index']
  #allocation1 [shape = 'u32[72,128]{1,0:T(1,128)}', space=vmem, size = 0x9000, scoped, tag = 'internal scratch']
  #allocation2 [shape = 'bf16[16,128]{1,0:T(8,128)(2,1)}', space=vmem, size = 0x1000, scoped, tag = 'scratch operand']
  %s0 = inlined_call_operand.hbm [shape: f32[8,32], index: 0, kind: input, shape index: {}]
  %s1 = inlined_call_operand.hbm [shape: bf16[3,128,128], index: 1, kind: input, shape index: {}]
  %s2 = inlined_call_operand.hbm [shape: f32[3,1,128], index: 2, kind: input, shape index: {}]
  %s3 = inlined_call_operand.hbm [shape: f32[16,128], index: 3, kind: output, shape index: {}]
  %s4 = sld [smem:[#allocation0]]
  $region69: #{tpu_custom_call.1} parent=0
    _
  %s6 = ssub.s32 1, %s4
  %s7 = scalar_select 0, %s6, %s4
  $region1: #{tpu_custom_call.1} parent=0
    #allocation3 [shape = 'u8[4096]{0}', space=vmem, size = 0x1000, scoped, tag = 'input window, operand 0, single buffered']
    #allocation4 [shape = 's32[2]{0}', space=sflag, size = 0x8, scoped, tag = 'scoped memory for tpu_custom_call.1']
    #allocation5 [shape = 's32[2]{0}', space=sflag, size = 0x8, scoped, tag = 'scoped memory for tpu_custom_call.1']
    #allocation6 [shape = 'u8[65536]{0}', space=vmem, size = 0x10000, scoped, tag = 'input window, operand 1']
    #allocation7 [shape = 's32[2]{0}', space=sflag, size = 0x8, scoped, tag = 'scoped memory for tpu_custom_call.1']
    #allocation8 [shape = 'u8[1024]{0}', space=vmem, size = 0x400, scoped, tag = 'input window, operand 2']
    #allocation9 [shape = 'u8[8192]{0}', space=vmem, size = 0x2000, scoped, tag = 'output window, operand 0, single buffered']
    %8 = vsyncpa [#allocation4], 0
    %9 = vsyncpa [#allocation7], 0
    %s10 = scalar_lea.sflag [#allocation7], 1
    %11 = vsyncpa %s10, 0
    %12 = vsyncpa [#allocation5], 0
    loop: start=0, step=1, limit=5
    $region2: #{tpu_custom_call.1} parent=1 // loop_pre_header
      _
    $region3: #{tpu_custom_call.1} parent=1 // loop_header
      %s14 = sphi 0, %s18
      %p15 = scmp.ge.s32.totalorder %s14, 5
      %s22 = sphi 0, %s22
      %s24 = sphi 0, %s22
      %s25 = sphi 0, %s24
      %s39 = sphi 0, %s25
      %s45 = sphi 0, %s47
      %s48 = sphi 0, %s45
      %s49 = sphi 0, %s48
      %s65 = sphi 0, %s49
      %s71 = sphi 0, %s73
      %s74 = sphi 0, %s71
      %s75 = sphi 0, %s74
      %s91 = sphi 0, %s75
      %s95 = sphi 0, %s95
      %s97 = sphi 0, %s95
      %s98 = sphi 0, %s97
      %s112 = sphi 0, %s98
    $region4: #{tpu_custom_call.1} parent=1 // loop_header_branch
      %17 = sbr.rel (%p15) target = $region8
    $region5: #{tpu_custom_call.1} parent=1 // loop_body
      %s19 = ssub.s32 %s14, 1
      %s20 = ssub.s32 %s14, 2
      %s21 = sadd.s32 %s14, 1
      %s23 = sadd.s32 %s22, 1
      %p26 = scmp.eq.s32.totalorder %s14, 2
      %p27 = scmp.ne.s32.totalorder %s22, %s24
      %p28 = scmp.eq.s32.totalorder %s14, 0
      %p29 = por %p27, %p28
      %p30 = scmp.ne.s32.totalorder %s22, %s24
      %p31 = scmp.eq.s32.totalorder %s19, 2
      %p32 = por %p30, %p31
      %p33 = scmp.ne.s32.totalorder %s24, %s25
      %p34 = scmp.eq.s32.totalorder %s19, 0
      %p35 = por %p33, %p34
      %p36 = scmp.ne.s32.totalorder %s24, %s25
      %p37 = scmp.eq.s32.totalorder %s20, 2
      %p38 = por %p36, %p37
      %p40 = scmp.ne.s32.totalorder %s25, %s39
      %p41 = scmp.eq.s32.totalorder %s20, 0
      %p42 = por %p40, %p41
      %s43 = ssub.s32 %s14, %s21
      %p44 = scmp.eq.s32.totalorder %s43, 0
      %s46 = sadd.s32 %s45, 1
      %s47 = scalar_select %p44, %s45, %s46
      %p50 = pneg %p44
      %p51 = scmp.eq.s32.totalorder %s14, 2
      %p52 = por %p50, %p51
      %p53 = scmp.ne.s32.totalorder %s45, %s48
      %p54 = scmp.eq.s32.totalorder %s14, 0
      %p55 = por %p53, %p54
      %p56 = scmp.ne.s32.totalorder %s45, %s48
      %p57 = scmp.eq.s32.totalorder %s19, 2
      %p58 = por %p56, %p57
      %p59 = scmp.ne.s32.totalorder %s48, %s49
      %p60 = scmp.eq.s32.totalorder %s19, 0
      %p61 = por %p59, %p60
      %p62 = scmp.ne.s32.totalorder %s48, %s49
      %p63 = scmp.eq.s32.totalorder %s20, 2
      %p64 = por %p62, %p63
      %p66 = scmp.ne.s32.totalorder %s49, %s65
      %p67 = scmp.eq.s32.totalorder %s20, 0
      %p68 = por %p66, %p67
      %s69 = ssub.s32 %s14, %s21
      %p70 = scmp.eq.s32.totalorder %s69, 0
      %s72 = sadd.s32 %s71, 1
      %s73 = scalar_select %p70, %s71, %s72
      %p76 = pneg %p70
      %p77 = scmp.eq.s32.totalorder %s14, 2
      %p78 = por %p76, %p77
      %p79 = scmp.ne.s32.totalorder %s71, %s74
      %p80 = scmp.eq.s32.totalorder %s14, 0
      %p81 = por %p79, %p80
      %p82 = scmp.ne.s32.totalorder %s71, %s74
      %p83 = scmp.eq.s32.totalorder %s19, 2
      %p84 = por %p82, %p83
      %p85 = scmp.ne.s32.totalorder %s74, %s75
      %p86 = scmp.eq.s32.totalorder %s19, 0
      %p87 = por %p85, %p86
      %p88 = scmp.ne.s32.totalorder %s74, %s75
      %p89 = scmp.eq.s32.totalorder %s20, 2
      %p90 = por %p88, %p89
      %p92 = scmp.ne.s32.totalorder %s75, %s91
      %p93 = scmp.eq.s32.totalorder %s20, 0
      %p94 = por %p92, %p93
      %s96 = sadd.s32 %s95, 1
      %p99 = scmp.eq.s32.totalorder %s14, 2
      %p100 = scmp.ne.s32.totalorder %s95, %s97
      %p101 = scmp.eq.s32.totalorder %s14, 0
      %p102 = por %p100, %p101
      %p103 = scmp.ne.s32.totalorder %s95, %s97
      %p104 = scmp.eq.s32.totalorder %s19, 2
      %p105 = por %p103, %p104
      %p106 = scmp.ne.s32.totalorder %s97, %s98
      %p107 = scmp.eq.s32.totalorder %s19, 0
      %p108 = por %p106, %p107
      %p109 = scmp.ne.s32.totalorder %s97, %s98
      %p110 = scmp.eq.s32.totalorder %s20, 2
      %p111 = por %p109, %p110
      %p113 = scmp.ne.s32.totalorder %s98, %s112
      %p114 = scmp.eq.s32.totalorder %s20, 0
      %p115 = por %p113, %p114
      %p116 = scmp.le.s32.totalorder 1, %s14
      %p117 = scmp.lt.s32.totalorder %s14, 4
      %p118 = pnand %p116, %p117
      %p119 = pneg %p118
      // Predicated region
      $region9: #{tpu_custom_call.1} parent=5 // pred_check
        _
      $region10: #{tpu_custom_call.1} parent=5 // pred_check_branch
        %121 = sbr.rel (%p118) target = $region12
      $region11: #{tpu_custom_call.1} parent=5 // pred_region
        %s122 = ssub.s32 %s14, 1
        // Predicated region
        $region13: #{tpu_custom_call.1} parent=11 // pred_check
          %p123 = pneg %p35
        $region14: #{tpu_custom_call.1} parent=11 // pred_check_branch
          %125 = sbr.rel (%p123) target = $region16
        $region15: #{tpu_custom_call.1} parent=11 // pred_region
          %127 = vsyncadd [#allocation4], 0
          %s129 = sshll.u32 %s0, 4
          %s130 = int_to_ptr.hbm [resolvable:$true] %s129
          %s131 = sshll.u32 [#allocation3], 4
          %s132 = int_to_ptr.vmem [resolvable:$true] %s131
          %134 = dma.hbm_to_vmem [thread:$0]  %s130, 128, %s132, [#allocation4]
        $region16: #{tpu_custom_call.1} parent=11 // pred_fallthru
          _
      $region12: #{tpu_custom_call.1} parent=5 // pred_fallthru
        _
      %p135 = scmp.lt.s32.totalorder %s14, 3
      // Predicated region
      $region17: #{tpu_custom_call.1} parent=5 // pred_check
        %p136 = pneg %p135
      $region18: #{tpu_custom_call.1} parent=5 // pred_check_branch
        %138 = sbr.rel (%p136) target = $region20
      $region19: #{tpu_custom_call.1} parent=5 // pred_region
        // Predicated region
        $region21: #{tpu_custom_call.1} parent=19 // pred_check
          %p139 = pneg %p55
        $region22: #{tpu_custom_call.1} parent=19 // pred_check_branch
          %141 = sbr.rel (%p139) target = $region24
        $region23: #{tpu_custom_call.1} parent=19 // pred_region
          %s142 = sand.u32 %s14, 1
          %s143 = scalar_lea.sflag [#allocation7], %s142
          %s144 = sand.u32 %s45, 1
          %s145 = smul.addr %s144, 64
          %s146 = scalar_lea.vmem [#allocation6], %s145
          %148 = vsyncadd %s143, 0
          %s149 = smul.addr %s14, 16
          %s150 = smul.addr %s149, 4
          %s151 = scalar_lea.hbm %s1, %s150
          %s152 = sshll.u32 %s151, 4
          %s153 = int_to_ptr.hbm [resolvable:$true] %s152
          %s154 = sshll.u32 %s146, 4
          %s155 = int_to_ptr.vmem [resolvable:$true] %s154
          %160 = dma.hbm_to_vmem [thread:$0]  %s153, 1024, %s155, %s143, 64, 64, 4
        $region24: #{tpu_custom_call.1} parent=19 // pred_fallthru
          _
        // Predicated region
        $region25: #{tpu_custom_call.1} parent=19 // pred_check
          %p161 = pneg %p81
        $region26: #{tpu_custom_call.1} parent=19 // pred_check_branch
          %163 = sbr.rel (%p161) target = $region28
        $region27: #{tpu_custom_call.1} parent=19 // pred_region
          %s164 = sand.u32 %s14, 1
          %s165 = scalar_lea.sflag [#allocation7], %s164
          %s166 = sand.u32 %s71, 1
          %s167 = scalar_lea.vmem [#allocation8], %s166
          %169 = vsyncadd %s165, 0
          %s170 = scalar_lea.hbm %s2, %s14
          %s172 = sshll.u32 %s170, 4
          %s173 = int_to_ptr.hbm [resolvable:$true] %s172
          %s174 = sshll.u32 %s167, 4
          %s175 = int_to_ptr.vmem [resolvable:$true] %s174
          %177 = dma.hbm_to_vmem [thread:$0]  %s173, 16, %s175, %s165
        $region28: #{tpu_custom_call.1} parent=19 // pred_fallthru
          _
      $region20: #{tpu_custom_call.1} parent=5 // pred_fallthru
        _
      %p178 = scmp.le.s32.totalorder 1, %s14
      %p179 = scmp.lt.s32.totalorder %s14, 4
      %p180 = pnand %p178, %p179
      %p181 = pneg %p180
      // Predicated region
      $region29: #{tpu_custom_call.1} parent=5 // pred_check
        _
      $region30: #{tpu_custom_call.1} parent=5 // pred_check_branch
        %183 = sbr.rel (%p180) target = $region32
      $region31: #{tpu_custom_call.1} parent=5 // pred_region
        %s184 = ssub.s32 %s14, 1
        // Predicated region
        $region33: #{tpu_custom_call.1} parent=31 // pred_check
          %p185 = pneg %p35
        $region34: #{tpu_custom_call.1} parent=31 // pred_check_branch
          %187 = sbr.rel (%p185) target = $region36
        $region35: #{tpu_custom_call.1} parent=31 // pred_region
          %189 = dma.done [#allocation4], 128
        $region36: #{tpu_custom_call.1} parent=31 // pred_fallthru
          _
        %s190 = sand.u32 %s19, 1
        %s191 = scalar_lea.sflag [#allocation7], %s190
        %s192 = sand.u32 %s48, 1
        %s193 = smul.addr %s192, 64
        %s194 = scalar_lea.vmem [#allocation6], %s193
        // Predicated region
        $region37: #{tpu_custom_call.1} parent=31 // pred_check
          %p195 = pneg %p61
        $region38: #{tpu_custom_call.1} parent=31 // pred_check_branch
          %197 = sbr.rel (%p195) target = $region40
        $region39: #{tpu_custom_call.1} parent=31 // pred_region
          %199 = dma.done %s191, 1024
        $region40: #{tpu_custom_call.1} parent=31 // pred_fallthru
          _
        %s200 = sand.u32 %s19, 1
        %s201 = scalar_lea.sflag [#allocation7], %s200
        %s202 = sand.u32 %s74, 1
        %s203 = scalar_lea.vmem [#allocation8], %s202
        // Predicated region
        $region41: #{tpu_custom_call.1} parent=31 // pred_check
          %p204 = pneg %p87
        $region42: #{tpu_custom_call.1} parent=31 // pred_check_branch
          %206 = sbr.rel (%p204) target = $region44
        $region43: #{tpu_custom_call.1} parent=31 // pred_region
          %208 = dma.done %s201, 16
        $region44: #{tpu_custom_call.1} parent=31 // pred_fallthru
          _
        %p209 = pneg %p35
        %p210 = pneg %p32
        %s211 = sand.u32 %s19, 1
        %s212 = scalar_lea.sflag [#allocation7], %s211
        %s213 = sand.u32 %s48, 1
        %s214 = smul.addr %s213, 64
        %s215 = scalar_lea.vmem [#allocation6], %s214
        %p216 = pneg %p61
        %p217 = pneg %p58
        %s218 = sand.u32 %s19, 1
        %s219 = scalar_lea.sflag [#allocation7], %s218
        %s220 = sand.u32 %s74, 1
        %s221 = scalar_lea.vmem [#allocation8], %s220
        %p222 = pneg %p87
        %p223 = pneg %p84
        %p224 = pneg %p108
        %p225 = pneg %p105
        %p227 = scmp.eq.s32.totalorder %s19, 0
        // Predicated region
        $region45: #{tpu_custom_call.1} parent=31 // pred_check
          %p228 = pneg %p227
        $region46: #{tpu_custom_call.1} parent=31 // pred_check_branch
          %230 = sbr.rel (%p228) target = $region48
        $region47: #{tpu_custom_call.1} parent=31 // pred_region
          %231 = vst [vmem:[#allocation2] sm:$0xf] 0
          %232 = vst [vmem:[#allocation2 + $0x4] sm:$0xf] 0
          %v233 = vld [vmem:[#allocation3] sm:$0xff]
          %v234 = vpack.c.bf16 %v233, %v233
          %vm235 = vcmask 257024
          %236 = vst.msk [vmem:[#allocation2] sm:$0xf] %vm235, %v234
        $region48: #{tpu_custom_call.1} parent=31 // pred_fallthru
          _
        %v237 = vld [vmem:[#allocation2] sm:$0xf]
        %v238 = vld [vmem:[#allocation2 + $0x4] sm:$0xf]
        %v239 = vld [vmem:[%s194] sm:$0xf]
        %v240 = vld [vmem:[%s194 + $0x4] sm:$0xf]
        %v241 = vld [vmem:[%s194 + $0x8] sm:$0xf]
        %v242 = vld [vmem:[%s194 + $0xc] sm:$0xf]
        %v243 = vld [vmem:[%s194 + $0x10] sm:$0xf]
        %v244 = vld [vmem:[%s194 + $0x14] sm:$0xf]
        %v245 = vld [vmem:[%s194 + $0x18] sm:$0xf]
        %v246 = vld [vmem:[%s194 + $0x1c] sm:$0xf]
        %v247 = vld [vmem:[%s194 + $0x20] sm:$0xf]
        %v248 = vld [vmem:[%s194 + $0x24] sm:$0xf]
        %v249 = vld [vmem:[%s194 + $0x28] sm:$0xf]
        %v250 = vld [vmem:[%s194 + $0x2c] sm:$0xf]
        %v251 = vld [vmem:[%s194 + $0x30] sm:$0xf]
        %v252 = vld [vmem:[%s194 + $0x34] sm:$0xf]
        %v253 = vld [vmem:[%s194 + $0x38] sm:$0xf]
        %v254 = vld [vmem:[%s194 + $0x3c] sm:$0xf]
        %v255 = vld [vmem:[%s203] sm:$0x1]
        %v257 = vperm.slane %v255, 0
        %v261 = vunpack.c.l.b16 %v237
        %v262 = vunpack.c.l.b16 %v238
        %v263 = vpack.c.b16 %v262, %v261
        %v281 = vunpack.c.l.b16 %v239
        %v282 = vunpack.c.l.b16 %v240
        %v283 = vunpack.c.l.b16 %v241
        %v284 = vunpack.c.l.b16 %v242
        %v285 = vunpack.c.l.b16 %v243
        %v286 = vunpack.c.l.b16 %v244
        %v287 = vunpack.c.l.b16 %v245
        %v288 = vunpack.c.l.b16 %v246
        %v289 = vunpack.c.l.b16 %v247
        %v290 = vunpack.c.l.b16 %v248
        %v291 = vunpack.c.l.b16 %v249
        %v292 = vunpack.c.l.b16 %v250
        %v293 = vunpack.c.l.b16 %v251
        %v294 = vunpack.c.l.b16 %v252
        %v295 = vunpack.c.l.b16 %v253
        %v296 = vunpack.c.l.b16 %v254
        %v297 = vpack.c.b16 %v282, %v281
        %v298 = vpack.c.b16 %v284, %v283
        %v299 = vpack.c.b16 %v286, %v285
        %v300 = vpack.c.b16 %v288, %v287
        %v301 = vpack.c.b16 %v290, %v289
        %v302 = vpack.c.b16 %v292, %v291
        %v303 = vpack.c.b16 %v294, %v293
        %v304 = vpack.c.b16 %v296, %v295
        %313 = vmatpush.bf16.msra.mxu0 %v304
        %314 = vmatpush.bf16.msra.mxu0 %v303
        %315 = vmatpush.bf16.msra.mxu0 %v302
        %316 = vmatpush.bf16.msra.mxu0 %v301
        %317 = vmatpush.bf16.msra.mxu0 %v300
        %318 = vmatpush.bf16.msra.mxu0 %v299
        %319 = vmatpush.bf16.msra.mxu0 %v298
        %320 = vmatpush.bf16.msra.mxu0 %v297
        %321 = vmatmul.bf16.gmra.mxu0 %v263
        %v322 = vpop.f32.mrf.mxu0
        %v323 = vadd.f32 %v257, %v322
        %v324 = vpop.f32.mrf.mxu0
        %v325 = vadd.f32 %v257, %v324
        %326 = vdwg.mxu0
        %p327 = scmp.lt.s32.totalorder %s19, 2
        // Predicated region
        $region49: #{tpu_custom_call.1} parent=31 // pred_check
          %p328 = pneg %p327
        $region50: #{tpu_custom_call.1} parent=31 // pred_check_branch
          %330 = sbr.rel (%p328) target = $region52
        $region51: #{tpu_custom_call.1} parent=31 // pred_region
          %v331 = vmax.f32 %v323, 0.0
          %v332 = vmax.f32 %v325, 0.0
          %v333 = vpack.c.bf16 %v331, %v331
          %v334 = vpack.c.bf16 %v332, %v332
          %335 = vst [vmem:[#allocation2] sm:$0xf] %v333
          %336 = vst [vmem:[#allocation2 + $0x4] sm:$0xf] %v334
        $region52: #{tpu_custom_call.1} parent=31 // pred_fallthru
          _
        %p337 = scmp.eq.s32.totalorder %s19, 2
        // Predicated region
        $region53: #{tpu_custom_call.1} parent=31 // pred_check
          %p338 = pneg %p337
        $region54: #{tpu_custom_call.1} parent=31 // pred_check_branch
          %340 = sbr.rel (%p338) target = $region56
        $region55: #{tpu_custom_call.1} parent=31 // pred_region
          %341 = vst [vmem:[#allocation9] sm:$0xff] %v323
          %342 = vst [vmem:[#allocation9 + $0x8] sm:$0xff] %v325
        $region56: #{tpu_custom_call.1} parent=31 // pred_fallthru
          _
        // Predicated region
        $region57: #{tpu_custom_call.1} parent=31 // pred_check
          %p343 = pneg %p105
        $region58: #{tpu_custom_call.1} parent=31 // pred_check_branch
          %345 = sbr.rel (%p343) target = $region60
        $region59: #{tpu_custom_call.1} parent=31 // pred_region
          %347 = vsyncadd [#allocation5], 0
          %s348 = sshll.u32 [#allocation9], 4
          %s349 = int_to_ptr.vmem [resolvable:$true] %s348
          %s350 = sshll.u32 %s3, 4
          %s351 = int_to_ptr.hbm [resolvable:$true] %s350
          %356 = dma.vmem_to_hbm [thread:$0]  %s349, 256, %s351, [#allocation5], 128, 128, 8
        $region60: #{tpu_custom_call.1} parent=31 // pred_fallthru
          _
        // Predicated region
        $region61: #{tpu_custom_call.1} parent=31 // pred_check
          %p357 = pneg %p105
        $region62: #{tpu_custom_call.1} parent=31 // pred_check_branch
          %359 = sbr.rel (%p357) target = $region64
        $region63: #{tpu_custom_call.1} parent=31 // pred_region
          %361 = dma.done [#allocation5], 256
        $region64: #{tpu_custom_call.1} parent=31 // pred_fallthru
          _
      $region32: #{tpu_custom_call.1} parent=5 // pred_fallthru
        _
      %p362 = scmp.le.s32.totalorder 2, %s14
      // Predicated region
      $region65: #{tpu_custom_call.1} parent=5 // pred_check
        %p363 = pneg %p362
      $region66: #{tpu_custom_call.1} parent=5 // pred_check_branch
        %365 = sbr.rel (%p363) target = $region68
      $region67: #{tpu_custom_call.1} parent=5 // pred_region
        %s366 = ssub.s32 %s14, 2
      $region68: #{tpu_custom_call.1} parent=5 // pred_fallthru
        _
    $region6: #{tpu_custom_call.1} parent=1 // loop_footer
      %s18 = sadd.s32 1, %s14
    $region7: #{tpu_custom_call.1} parent=1 // loop_footer_branch
      %13 = sbr.rel target = $region3
    $region8: #{tpu_custom_call.1} parent=1 // loop_exit
      _
    %367 = vsyncpa [#allocation4], 1
    %s368 = scalar_lea.sflag [#allocation4], 1
    %369 = vsyncpa %s368, 1
    %370 = vsyncpa [#allocation7], 1
    %s371 = scalar_lea.sflag [#allocation7], 1
    %372 = vsyncpa %s371, 1
    %373 = vsyncpa [#allocation5], 1
    %s374 = scalar_lea.sflag [#allocation5], 1
    %375 = vsyncpa %s374, 1

</llo_original>
